<compile_context>
chip_gen: v6e
topology: v6e:2x2x1
jax: 0.10.0
libtpu: 0.0.40
codegen_flags: <defaults>
</compile_context>

<pallas_src>
import jax
import jax.numpy as jnp
from jax.experimental import pallas as pl
from jax.experimental.pallas import tpu as pltpu

MATMUL_DTYPE = jnp.bfloat16   # MXU operand dtype (accumulation stays f32)


# ----------------------------- in-kernel helpers -----------------------------

def _erf(x):
    # Abramowitz & Stegun 7.1.26 polynomial (|err| < 1.5e-7 -> f32 accurate).
    # Matches PyTorch's exact (erf-based) nn.GELU to float32 precision.
    a1, a2, a3, a4, a5 = 0.254829592, -0.284496736, 1.421413741, -1.453152027, 1.061405429
    p = 0.3275911
    s = jnp.where(x >= 0.0, 1.0, -1.0)
    ax = jnp.abs(x)
    t = 1.0 / (1.0 + p * ax)
    poly = ((((a5 * t + a4) * t + a3) * t + a2) * t + a1) * t
    return s * (1.0 - poly * jnp.exp(-ax * ax))


def _gelu(x):
    return 0.5 * x * (1.0 + _erf(x * 0.7071067811865476))


# --------------------------------- kernel ------------------------------------

def mlp_kernel(x_ref, w1_ref, b1_ref, w2_ref, b2_ref, o_ref):
    # x tile: (TM, C) f32.  Weights are already bf16 (cast once in the wrapper).
    x = x_ref[...]

    # fc1: bf16 operands, f32 accumulation; bias add + GELU stay in f32.
    h = jnp.dot(x.astype(MATMUL_DTYPE), w1_ref[...],
                preferred_element_type=jnp.float32) + b1_ref[...]
    h = _gelu(h)

    # fc2: bf16 operands, f32 accumulation.
    o = jnp.dot(h.astype(MATMUL_DTYPE), w2_ref[...],
                preferred_element_type=jnp.float32) + b2_ref[...]
    o_ref[...] = o.astype(o_ref.dtype)


# --------------------------------- wrapper -----------------------------------

def _pick_row_tile(m):
    # Largest "nice" sublane-aligned divisor; otherwise use the whole slab
    # (a block equal to the full array dims is always legal).
    for t in (1024, 512, 256, 128, 64, 32, 16, 8):
        if m % t == 0:
            return t
    return m


def mlp_forward(x, params):
    """x: (..., C) float32.  params: dict with fc1/fc2 weights in torch layout."""
    orig_shape = x.shape
    C = orig_shape[-1]
    x2 = x.reshape(-1, C).astype(jnp.float32)
    M = x2.shape[0]
    H = params["fc1_w"].shape[0]

    # torch nn.Linear stores weight as (out, in); transpose to (in, out) and
    # cast to the MXU operand dtype once, outside the kernel.
    w1 = jnp.asarray(params["fc1_w"].T, MATMUL_DTYPE)        # (C, H)
    b1 = jnp.asarray(params["fc1_b"], jnp.float32).reshape(1, H)
    w2 = jnp.asarray(params["fc2_w"].T, MATMUL_DTYPE)        # (H, C)
    b2 = jnp.asarray(params["fc2_b"], jnp.float32).reshape(1, C)

    tm = _pick_row_tile(M)
    grid = (M // tm,)

    out2 = pl.pallas_call(
        mlp_kernel,
        out_shape=jax.ShapeDtypeStruct((M, C), jnp.float32),
        grid=grid,
        in_specs=[
            pl.BlockSpec((tm, C), lambda i: (i, 0)),   # x rows (tiled)
            pl.BlockSpec((C, H), lambda i: (0, 0)),    # fc1 weight (resident)
            pl.BlockSpec((1, H), lambda i: (0, 0)),    # fc1 bias
            pl.BlockSpec((H, C), lambda i: (0, 0)),    # fc2 weight (resident)
            pl.BlockSpec((1, C), lambda i: (0, 0)),    # fc2 bias
        ],
        out_specs=pl.BlockSpec((tm, C), lambda i: (i, 0)),
        compiler_params=pltpu.CompilerParams(
            dimension_semantics=("parallel",)),        # megacore-friendly on v7x
    )(x2, w1, b1, w2, b2)

    return out2.reshape(orig_shape)


# ----------------------------- parameter setup --------------------------------

def init_mlp_params(key, in_features, mlp_ratio):
    hidden = round(in_features * mlp_ratio) if mlp_ratio else in_features
    k1, k2, k3, k4 = jax.random.split(key, 4)

    def uniform(k, shape, bound):
        return jax.random.uniform(k, shape, jnp.float32, -bound, bound)

    # nn.Linear default init: U(-1/sqrt(fan_in), 1/sqrt(fan_in)), weight (out, in).
    b1 = 1.0 / (in_features ** 0.5)
    b2 = 1.0 / (hidden ** 0.5)
    return {
        "fc1_w": uniform(k1, (hidden, in_features), b1),
        "fc1_b": uniform(k2, (hidden,), b1),
        "fc2_w": uniform(k3, (in_features, hidden), b2),
        "fc2_b": uniform(k4, (in_features,), b2),
    }


# ----------------------------------- main -------------------------------------

if __name__ == "__main__":
    # Mlp(in_features=32, mlp_ratio=4.0) applied to tokens of an 8x8 feature map.
    B, N, C, mlp_ratio = 2, 64, 32, 4.0

    key = jax.random.PRNGKey(0)
    kx, kp = jax.random.split(key)
    x = jax.random.normal(kx, (B, N, C), jnp.float32)
    params = init_mlp_params(kp, C, mlp_ratio)

    out = mlp_forward(x, params)
    jax.block_until_ready(out)
    assert out.shape == (B, N, C)
    assert bool(jnp.all(jnp.isfinite(out)))
    print("KERNEL_OK")
</pallas_src>

<mosaic_0001>
module attributes {stable_mosaic.version = 11 : i64} {
  func.func @mlp_kernel(%arg0: i32, %arg1: memref<128x32xf32, #tpu.memory_space<vmem>>, %arg2: memref<32x128xbf16, #tpu.memory_space<vmem>>, %arg3: memref<1x128xf32, #tpu.memory_space<vmem>>, %arg4: memref<128x32xbf16, #tpu.memory_space<vmem>>, %arg5: memref<1x32xf32, #tpu.memory_space<vmem>>, %arg6: memref<128x32xf32, #tpu.memory_space<vmem>>) attributes {dimension_semantics = [#tpu.dimension_semantics<parallel>], iteration_bounds = array<i64: 1>, scalar_prefetch = 0 : i64, scratch_operands = 0 : i64, tpu.core_type = #tpu.core_type<tc>, window_params = [{transform_indices = @transform_0, window_bounds = array<i64: 128, 32>}, {pipeline_mode = #tpu.pipeline_mode<synchronous>, transform_indices = @transform_1, window_bounds = array<i64: 32, 128>}, {pipeline_mode = #tpu.pipeline_mode<synchronous>, transform_indices = @transform_2, window_bounds = array<i64: 1, 128>}, {pipeline_mode = #tpu.pipeline_mode<synchronous>, transform_indices = @transform_3, window_bounds = array<i64: 128, 32>}, {pipeline_mode = #tpu.pipeline_mode<synchronous>, transform_indices = @transform_4, window_bounds = array<i64: 1, 32>}, {transform_indices = @transform_5, window_bounds = array<i64: 128, 32>}]} {
    %c0 = arith.constant 0 : index
    %c0_0 = arith.constant 0 : index
    %0 = vector.load %arg1[%c0, %c0_0] : memref<128x32xf32, #tpu.memory_space<vmem>>, vector<128x32xf32>
    %1 = arith.truncf %0 : vector<128x32xf32> to vector<128x32xbf16>
    %c0_1 = arith.constant 0 : index
    %c0_2 = arith.constant 0 : index
    %2 = vector.load %arg2[%c0_1, %c0_2] : memref<32x128xbf16, #tpu.memory_space<vmem>>, vector<32x128xbf16>
    %cst = arith.constant dense<0.000000e+00> : vector<128x128xf32>
    %3 = tpu.matmul %1, %2, %cst {dimension_numbers = #tpu.dot_dimension_numbers<[1], [0], [0], [1], [0, 0, 1, 1], [], []>} : vector<128x32xbf16>, vector<32x128xbf16>, vector<128x128xf32> -> vector<128x128xf32>
    %c0_3 = arith.constant 0 : index
    %c0_4 = arith.constant 0 : index
    %4 = vector.load %arg3[%c0_3, %c0_4] : memref<1x128xf32, #tpu.memory_space<vmem>>, vector<1x128xf32>
    %5 = vector.broadcast %4 : vector<1x128xf32> to vector<128x128xf32>
    %6 = arith.addf %3, %5 : vector<128x128xf32>
    %cst_5 = arith.constant 5.000000e-01 : f32
    %7 = vector.broadcast %cst_5 : f32 to vector<128x128xf32>
    %8 = arith.mulf %7, %6 : vector<128x128xf32>
    %cst_6 = arith.constant 0.707106769 : f32
    %9 = vector.broadcast %cst_6 : f32 to vector<128x128xf32>
    %10 = arith.mulf %6, %9 : vector<128x128xf32>
    %cst_7 = arith.constant 0.000000e+00 : f32
    %11 = vector.broadcast %cst_7 : f32 to vector<128x128xf32>
    %12 = arith.cmpf oge, %10, %11 : vector<128x128xf32>
    %cst_8 = arith.constant 1.000000e+00 : f32
    %cst_9 = arith.constant -1.000000e+00 : f32
    %13 = vector.broadcast %cst_8 : f32 to vector<128x128xf32>
    %14 = vector.broadcast %cst_9 : f32 to vector<128x128xf32>
    %15 = arith.select %12, %13, %14 : vector<128x128xi1>, vector<128x128xf32>
    %16 = math.absf %10 : vector<128x128xf32>
    %cst_10 = arith.constant 0.327591091 : f32
    %17 = vector.broadcast %cst_10 : f32 to vector<128x128xf32>
    %18 = arith.mulf %17, %16 : vector<128x128xf32>
    %cst_11 = arith.constant 1.000000e+00 : f32
    %19 = vector.broadcast %cst_11 : f32 to vector<128x128xf32>
    %20 = arith.addf %19, %18 : vector<128x128xf32>
    %cst_12 = arith.constant 1.000000e+00 : f32
    %21 = vector.broadcast %cst_12 : f32 to vector<128x128xf32>
    %22 = arith.divf %21, %20 : vector<128x128xf32>
    %cst_13 = arith.constant 1.06140542 : f32
    %23 = vector.broadcast %cst_13 : f32 to vector<128x128xf32>
    %24 = arith.mulf %23, %22 : vector<128x128xf32>
    %cst_14 = arith.constant -1.45315206 : f32
    %25 = vector.broadcast %cst_14 : f32 to vector<128x128xf32>
    %26 = arith.addf %24, %25 : vector<128x128xf32>
    %27 = arith.mulf %26, %22 : vector<128x128xf32>
    %cst_15 = arith.constant 1.42141378 : f32
    %28 = vector.broadcast %cst_15 : f32 to vector<128x128xf32>
    %29 = arith.addf %27, %28 : vector<128x128xf32>
    %30 = arith.mulf %29, %22 : vector<128x128xf32>
    %cst_16 = arith.constant -0.284496725 : f32
    %31 = vector.broadcast %cst_16 : f32 to vector<128x128xf32>
    %32 = arith.addf %30, %31 : vector<128x128xf32>
    %33 = arith.mulf %32, %22 : vector<128x128xf32>
    %cst_17 = arith.constant 0.254829586 : f32
    %34 = vector.broadcast %cst_17 : f32 to vector<128x128xf32>
    %35 = arith.addf %33, %34 : vector<128x128xf32>
    %36 = arith.mulf %35, %22 : vector<128x128xf32>
    %cst_18 = arith.constant 0.000000e+00 : f32
    %37 = vector.broadcast %cst_18 : f32 to vector<128x128xf32>
    %38 = arith.subf %37, %16 : vector<128x128xf32>
    %39 = arith.mulf %38, %16 : vector<128x128xf32>
    %40 = math.exp %39 : vector<128x128xf32>
    %41 = arith.mulf %36, %40 : vector<128x128xf32>
    %cst_19 = arith.constant 1.000000e+00 : f32
    %42 = vector.broadcast %cst_19 : f32 to vector<128x128xf32>
    %43 = arith.subf %42, %41 : vector<128x128xf32>
    %44 = arith.mulf %15, %43 : vector<128x128xf32>
    %cst_20 = arith.constant 1.000000e+00 : f32
    %45 = vector.broadcast %cst_20 : f32 to vector<128x128xf32>
    %46 = arith.addf %45, %44 : vector<128x128xf32>
    %47 = arith.mulf %8, %46 : vector<128x128xf32>
    %48 = arith.truncf %47 : vector<128x128xf32> to vector<128x128xbf16>
    %c0_21 = arith.constant 0 : index
    %c0_22 = arith.constant 0 : index
    %49 = vector.load %arg4[%c0_21, %c0_22] : memref<128x32xbf16, #tpu.memory_space<vmem>>, vector<128x32xbf16>
    %cst_23 = arith.constant dense<0.000000e+00> : vector<128x32xf32>
    %50 = tpu.matmul %48, %49, %cst_23 {dimension_numbers = #tpu.dot_dimension_numbers<[1], [0], [0], [1], [0, 0, 1, 1], [], []>} : vector<128x128xbf16>, vector<128x32xbf16>, vector<128x32xf32> -> vector<128x32xf32>
    %c0_24 = arith.constant 0 : index
    %c0_25 = arith.constant 0 : index
    %51 = vector.load %arg5[%c0_24, %c0_25] : memref<1x32xf32, #tpu.memory_space<vmem>>, vector<1x32xf32>
    %52 = vector.broadcast %51 : vector<1x32xf32> to vector<128x32xf32>
    %53 = arith.addf %50, %52 : vector<128x32xf32>
    %c0_26 = arith.constant 0 : index
    %c0_27 = arith.constant 0 : index
    %54 = vector.load %arg6[%c0_26, %c0_27] : memref<128x32xf32, #tpu.memory_space<vmem>>, vector<128x32xf32>
    tpu.vector_store %arg6[%c0_26, %c0_27], %53 {strides = array<i32>} : memref<128x32xf32, #tpu.memory_space<vmem>>, vector<128x32xf32>,
    return
  }
  func.func @transform_0(%arg0: i32) -> (i32, i32) {
    %c0_i32 = arith.constant 0 : i32
    %c0_i32_0 = arith.constant 0 : i32
    return %arg0, %c0_i32 : i32, i32
  }
  func.func @transform_1(%arg0: i32) -> (i32, i32) {
    %c0_i32 = arith.constant 0 : i32
    %c0_i32_0 = arith.constant 0 : i32
    %c0_i32_1 = arith.constant 0 : i32
    return %c0_i32, %c0_i32_0 : i32, i32
  }
  func.func @transform_2(%arg0: i32) -> (i32, i32) {
    %c0_i32 = arith.constant 0 : i32
    %c0_i32_0 = arith.constant 0 : i32
    %c0_i32_1 = arith.constant 0 : i32
    return %c0_i32, %c0_i32_0 : i32, i32
  }
  func.func @transform_3(%arg0: i32) -> (i32, i32) {
    %c0_i32 = arith.constant 0 : i32
    %c0_i32_0 = arith.constant 0 : i32
    %c0_i32_1 = arith.constant 0 : i32
    return %c0_i32, %c0_i32_0 : i32, i32
  }
  func.func @transform_4(%arg0: i32) -> (i32, i32) {
    %c0_i32 = arith.constant 0 : i32
    %c0_i32_0 = arith.constant 0 : i32
    %c0_i32_1 = arith.constant 0 : i32
    return %c0_i32, %c0_i32_0 : i32, i32
  }
  func.func @transform_5(%arg0: i32) -> (i32, i32) {
    %c0_i32 = arith.constant 0 : i32
    %c0_i32_0 = arith.constant 0 : i32
    return %arg0, %c0_i32 : i32, i32
  }
}

</mosaic_0001>

<llo_original>
// kernel: tpu_custom_call.1
$region0: #{tpu_custom_call.1}
  #allocation0 [shape = 'u32[]', space=smem, size = 0x4, offset = 0x4, fixed_abs, tag = 'smem constant byte address 0x4 - core index']
  #allocation1 [shape = 'u32[144,128]{1,0:T(1,128)}', space=vmem, size = 0x12000, scoped, tag = 'internal scratch']
  %s0 = inlined_call_operand.vmem [shape: f32[128,32], index: 0, kind: input, shape index: {}]
  %s1 = inlined_call_operand.vmem [shape: bf16[32,128], index: 1, kind: input, shape index: {}]
  %s2 = inlined_call_operand.vmem [shape: f32[1,128], index: 2, kind: input, shape index: {}]
  %s3 = inlined_call_operand.vmem [shape: bf16[128,32], index: 3, kind: input, shape index: {}]
  %s4 = inlined_call_operand.vmem [shape: f32[1,32], index: 4, kind: input, shape index: {}]
  %s5 = inlined_call_operand.vmem [shape: f32[128,32], index: 5, kind: output, shape index: {}]
  %s6 = sld [smem:[#allocation0]]
  $region30: #{tpu_custom_call.1} parent=0
    _
  %s8 = ssub.s32 1, %s6
  %s9 = scalar_select 0, %s8, %s6
  // Predicated region
  $region2: #{tpu_custom_call.1} parent=0 // pred_check
    _
  $region3: #{tpu_custom_call.1} parent=0 // pred_check_branch
    %11 = sbr.rel (0) target = $region5
  $region4: #{tpu_custom_call.1} parent=0 // pred_region
    _
  $region5: #{tpu_custom_call.1} parent=0 // pred_fallthru
    _
  // Predicated region
  $region6: #{tpu_custom_call.1} parent=0 // pred_check
    _
  $region7: #{tpu_custom_call.1} parent=0 // pred_check_branch
    %13 = sbr.rel (0) target = $region9
  $region8: #{tpu_custom_call.1} parent=0 // pred_region
    _
  $region9: #{tpu_custom_call.1} parent=0 // pred_fallthru
    _
  // Predicated region
  $region10: #{tpu_custom_call.1} parent=0 // pred_check
    _
  $region11: #{tpu_custom_call.1} parent=0 // pred_check_branch
    %15 = sbr.rel (0) target = $region13
  $region12: #{tpu_custom_call.1} parent=0 // pred_region
    _
  $region13: #{tpu_custom_call.1} parent=0 // pred_fallthru
    _
  // Predicated region
  $region14: #{tpu_custom_call.1} parent=0 // pred_check
    _
  $region15: #{tpu_custom_call.1} parent=0 // pred_check_branch
    %17 = sbr.rel (0) target = $region17
  $region16: #{tpu_custom_call.1} parent=0 // pred_region
    _
  $region17: #{tpu_custom_call.1} parent=0 // pred_fallthru
    _
  // Predicated region
  $region18: #{tpu_custom_call.1} parent=0 // pred_check
    _
  $region19: #{tpu_custom_call.1} parent=0 // pred_check_branch
    %19 = sbr.rel (0) target = $region21
  $region20: #{tpu_custom_call.1} parent=0 // pred_region
    _
  $region21: #{tpu_custom_call.1} parent=0 // pred_fallthru
    _
  %v21 = vld [vmem:[%s0] sm:$0xff]
  %v22 = vld [vmem:[%s0 + $0x8] sm:$0xff]
  %v23 = vld [vmem:[%s0 + $0x10] sm:$0xff]
  %v24 = vld [vmem:[%s0 + $0x18] sm:$0xff]
  %v25 = vld [vmem:[%s0 + $0x20] sm:$0xff]
  %v26 = vld [vmem:[%s0 + $0x28] sm:$0xff]
  %v27 = vld [vmem:[%s0 + $0x30] sm:$0xff]
  %v28 = vld [vmem:[%s0 + $0x38] sm:$0xff]
  %v29 = vld [vmem:[%s0 + $0x40] sm:$0xff]
  %v30 = vld [vmem:[%s0 + $0x48] sm:$0xff]
  %v31 = vld [vmem:[%s0 + $0x50] sm:$0xff]
  %v32 = vld [vmem:[%s0 + $0x58] sm:$0xff]
  %v33 = vld [vmem:[%s0 + $0x60] sm:$0xff]
  %v34 = vld [vmem:[%s0 + $0x68] sm:$0xff]
  %v35 = vld [vmem:[%s0 + $0x70] sm:$0xff]
  %v36 = vld [vmem:[%s0 + $0x78] sm:$0xff]
  %v37 = vpack.c.bf16 %v22, %v21
  %v38 = vpack.c.bf16 %v24, %v23
  %v39 = vpack.c.bf16 %v26, %v25
  %v40 = vpack.c.bf16 %v28, %v27
  %v41 = vpack.c.bf16 %v30, %v29
  %v42 = vpack.c.bf16 %v32, %v31
  %v43 = vpack.c.bf16 %v34, %v33
  %v44 = vpack.c.bf16 %v36, %v35
  %v45 = vld [vmem:[%s1] sm:$0xf]
  %v46 = vld [vmem:[%s1 + $0x4] sm:$0xf]
  %v47 = vld [vmem:[%s1 + $0x8] sm:$0xf]
  %v48 = vld [vmem:[%s1 + $0xc] sm:$0xf]
  %v49 = vld [vmem:[%s2] sm:$0x1]
  %v51 = vlaneseq
  %v52 = vshrl.u32 %v51, 7
  %v53 = vsub.s32 0, %v52
  %v54 = vrot.slane %v49, %v53
  %v60 = vunpack.c.l.b16 %v45
  %v61 = vunpack.c.l.b16 %v46
  %v62 = vunpack.c.l.b16 %v47
  %v63 = vunpack.c.l.b16 %v48
  %v64 = vpack.c.b16 %v61, %v60
  %v65 = vpack.c.b16 %v63, %v62
  %vm68 = vcmask 261120
  %v70 = vsel %vm68, %v37, 0
  %v73 = vsel %vm68, %v38, 0
  %v76 = vsel %vm68, %v39, 0
  %v79 = vsel %vm68, %v40, 0
  %v82 = vsel %vm68, %v41, 0
  %v85 = vsel %vm68, %v42, 0
  %v88 = vsel %vm68, %v43, 0
  %v91 = vsel %vm68, %v44, 0
  %93 = vmatprep.subr.bf16.mxu0 0
  %94 = vmatpush1.bf16.msra.mxu0 0
  %95 = vmatprep.subr.bf16.mxu0 0
  %96 = vmatpush1.bf16.msra.mxu0 0
  %97 = vmatprep.subr.bf16.mxu0 0
  %98 = vmatpush1.bf16.msra.mxu0 0
  %99 = vmatprep.subr.bf16.mxu0 0
  %100 = vmatpush1.bf16.msra.mxu0 0
  %101 = vmatprep.subr.bf16.mxu0 0
  %102 = vmatpush1.bf16.msra.mxu0 0
  %103 = vmatprep.subr.bf16.mxu0 0
  %104 = vmatpush1.bf16.msra.mxu0 0
  %105 = vmatprep.subr.bf16.mxu0 0
  %106 = vmatpush1.bf16.msra.mxu0 %v65
  %107 = vmatprep.subr.bf16.mxu0 0
  %108 = vmatpush1.bf16.msra.mxu0 %v64
  %109 = vmatprep.subr.bf16.mxu0 0
  %110 = vmatpush2.bf16.msra.mxu0 0
  %111 = vmatprep.subr.bf16.mxu0 0
  %112 = vmatpush2.bf16.msra.mxu0 0
  %113 = vmatprep.subr.bf16.mxu0 0
  %114 = vmatpush2.bf16.msra.mxu0 0
  %115 = vmatprep.subr.bf16.mxu0 0
  %116 = vmatpush2.bf16.msra.mxu0 0
  %117 = vmatprep.subr.bf16.mxu0 0
  %118 = vmatpush2.bf16.msra.mxu0 0
  %119 = vmatprep.subr.bf16.mxu0 0
  %120 = vmatpush2.bf16.msra.mxu0 0
  %121 = vmatprep.subr.bf16.mxu0 0
  %122 = vmatpush2.bf16.msra.mxu0 0
  %123 = vmatprep.subr.bf16.mxu0 0
  %124 = vmatpush2.bf16.msra.mxu0 0
  %125 = vmatprep.mubr.bf16.mxu0 0
  %126 = vmatmul.mubr.bf16.gmra.mxu0 %v70
  %v127 = vpop.f32.mrf.mxu0
  %v128 = vadd.f32 %v54, %v127
  %v129 = vpop.f32.mrf.mxu0
  %v130 = vpop.f32.mrf.mxu0
  %v131 = vadd.f32 %v54, %v130
  %v132 = vpop.f32.mrf.mxu0
  %133 = vmatprep.mubr.bf16.mxu0 0
  %134 = vmatmul.mubr.bf16.gmra.mxu0 %v73
  %v135 = vpop.f32.mrf.mxu0
  %v136 = vadd.f32 %v54, %v135
  %v137 = vpop.f32.mrf.mxu0
  %v138 = vpop.f32.mrf.mxu0
  %v139 = vadd.f32 %v54, %v138
  %v140 = vpop.f32.mrf.mxu0
  %141 = vmatprep.mubr.bf16.mxu0 0
  %142 = vmatmul.mubr.bf16.gmra.mxu0 %v76
  %v143 = vpop.f32.mrf.mxu0
  %v144 = vadd.f32 %v54, %v143
  %v145 = vpop.f32.mrf.mxu0
  %v146 = vpop.f32.mrf.mxu0
  %v147 = vadd.f32 %v54, %v146
  %v148 = vpop.f32.mrf.mxu0
  %149 = vmatprep.mubr.bf16.mxu0 0
  %150 = vmatmul.mubr.bf16.gmra.mxu0 %v79
  %v151 = vpop.f32.mrf.mxu0
  %v152 = vadd.f32 %v54, %v151
  %v153 = vpop.f32.mrf.mxu0
  %v154 = vpop.f32.mrf.mxu0
  %v155 = vadd.f32 %v54, %v154
  %v156 = vpop.f32.mrf.mxu0
  %157 = vmatprep.mubr.bf16.mxu0 0
  %158 = vmatmul.mubr.bf16.gmra.mxu0 %v82
  %v159 = vpop.f32.mrf.mxu0
  %v160 = vadd.f32 %v54, %v159
  %v161 = vpop.f32.mrf.mxu0
  %v162 = vpop.f32.mrf.mxu0
  %v163 = vadd.f32 %v54, %v162
  %v164 = vpop.f32.mrf.mxu0
  %165 = vmatprep.mubr.bf16.mxu0 0
  %166 = vmatmul.mubr.bf16.gmra.mxu0 %v85
  %v167 = vpop.f32.mrf.mxu0
  %v168 = vadd.f32 %v54, %v167
  %v169 = vpop.f32.mrf.mxu0
  %v170 = vpop.f32.mrf.mxu0
  %v171 = vadd.f32 %v54, %v170
  %v172 = vpop.f32.mrf.mxu0
  %173 = vmatprep.mubr.bf16.mxu0 0
  %174 = vmatmul.mubr.bf16.gmra.mxu0 %v88
  %v175 = vpop.f32.mrf.mxu0
  %v176 = vadd.f32 %v54, %v175
  %v177 = vpop.f32.mrf.mxu0
  %v178 = vpop.f32.mrf.mxu0
  %v179 = vadd.f32 %v54, %v178
  %v180 = vpop.f32.mrf.mxu0
  %181 = vmatprep.mubr.bf16.mxu0 0
  %182 = vmatmul.mubr.bf16.gmra.mxu0 %v91
  %v183 = vpop.f32.mrf.mxu0
  %v184 = vadd.f32 %v54, %v183
  %v185 = vpop.f32.mrf.mxu0
  %v186 = vpop.f32.mrf.mxu0
  %v187 = vadd.f32 %v54, %v186
  %v188 = vpop.f32.mrf.mxu0
  %189 = vdwg.mxu0
  %v190 = vmul.f32 %v128, 0.5
  %v191 = vmul.f32 %v131, 0.5
  %v192 = vmul.f32 %v136, 0.5
  %v193 = vmul.f32 %v139, 0.5
  %v194 = vmul.f32 %v144, 0.5
  %v195 = vmul.f32 %v147, 0.5
  %v196 = vmul.f32 %v152, 0.5
  %v197 = vmul.f32 %v155, 0.5
  %v198 = vmul.f32 %v160, 0.5
  %v199 = vmul.f32 %v163, 0.5
  %v200 = vmul.f32 %v168, 0.5
  %v201 = vmul.f32 %v171, 0.5
  %v202 = vmul.f32 %v176, 0.5
  %v203 = vmul.f32 %v179, 0.5
  %v204 = vmul.f32 %v184, 0.5
  %v205 = vmul.f32 %v187, 0.5
  %v206 = vmul.f32 %v128, 0.70710677
  %v207 = vmul.f32 %v131, 0.70710677
  %v208 = vmul.f32 %v136, 0.70710677
  %v209 = vmul.f32 %v139, 0.70710677
  %v210 = vmul.f32 %v144, 0.70710677
  %v211 = vmul.f32 %v147, 0.70710677
  %v212 = vmul.f32 %v152, 0.70710677
  %v213 = vmul.f32 %v155, 0.70710677
  %v214 = vmul.f32 %v160, 0.70710677
  %v215 = vmul.f32 %v163, 0.70710677
  %v216 = vmul.f32 %v168, 0.70710677
  %v217 = vmul.f32 %v171, 0.70710677
  %v218 = vmul.f32 %v176, 0.70710677
  %v219 = vmul.f32 %v179, 0.70710677
  %v220 = vmul.f32 %v184, 0.70710677
  %v221 = vmul.f32 %v187, 0.70710677
  %vm222 = vcmp.ge.f32.partialorder %v206, 0.0
  %vm223 = vcmp.ge.f32.partialorder %v207, 0.0
  %vm224 = vcmp.ge.f32.partialorder %v208, 0.0
  %vm225 = vcmp.ge.f32.partialorder %v209, 0.0
  %vm226 = vcmp.ge.f32.partialorder %v210, 0.0
  %vm227 = vcmp.ge.f32.partialorder %v211, 0.0
  %vm228 = vcmp.ge.f32.partialorder %v212, 0.0
  %vm229 = vcmp.ge.f32.partialorder %v213, 0.0
  %vm230 = vcmp.ge.f32.partialorder %v214, 0.0
  %vm231 = vcmp.ge.f32.partialorder %v215, 0.0
  %vm232 = vcmp.ge.f32.partialorder %v216, 0.0
  %vm233 = vcmp.ge.f32.partialorder %v217, 0.0
  %vm234 = vcmp.ge.f32.partialorder %v218, 0.0
  %vm235 = vcmp.ge.f32.partialorder %v219, 0.0
  %vm236 = vcmp.ge.f32.partialorder %v220, 0.0
  %vm237 = vcmp.ge.f32.partialorder %v221, 0.0
  %v238 = vsel %vm222, 1.0, -1.0
  %v239 = vsel %vm223, 1.0, -1.0
  %v240 = vsel %vm224, 1.0, -1.0
  %v241 = vsel %vm225, 1.0, -1.0
  %v242 = vsel %vm226, 1.0, -1.0
  %v243 = vsel %vm227, 1.0, -1.0
  %v244 = vsel %vm228, 1.0, -1.0
  %v245 = vsel %vm229, 1.0, -1.0
  %v246 = vsel %vm230, 1.0, -1.0
  %v247 = vsel %vm231, 1.0, -1.0
  %v248 = vsel %vm232, 1.0, -1.0
  %v249 = vsel %vm233, 1.0, -1.0
  %v250 = vsel %vm234, 1.0, -1.0
  %v251 = vsel %vm235, 1.0, -1.0
  %v252 = vsel %vm236, 1.0, -1.0
  %v253 = vsel %vm237, 1.0, -1.0
  %v254 = vand.u32 2147483647, %v206
  %v255 = vand.u32 2147483647, %v207
  %v256 = vand.u32 2147483647, %v208
  %v257 = vand.u32 2147483647, %v209
  %v258 = vand.u32 2147483647, %v210
  %v259 = vand.u32 2147483647, %v211
  %v260 = vand.u32 2147483647, %v212
  %v261 = vand.u32 2147483647, %v213
  %v262 = vand.u32 2147483647, %v214
  %v263 = vand.u32 2147483647, %v215
  %v264 = vand.u32 2147483647, %v216
  %v265 = vand.u32 2147483647, %v217
  %v266 = vand.u32 2147483647, %v218
  %v267 = vand.u32 2147483647, %v219
  %v268 = vand.u32 2147483647, %v220
  %v269 = vand.u32 2147483647, %v221
  %v270 = vmul.f32 %v254, 0.3275911
  %v271 = vmul.f32 %v255, 0.3275911
  %v272 = vmul.f32 %v256, 0.3275911
  %v273 = vmul.f32 %v257, 0.3275911
  %v274 = vmul.f32 %v258, 0.3275911
  %v275 = vmul.f32 %v259, 0.3275911
  %v276 = vmul.f32 %v260, 0.3275911
  %v277 = vmul.f32 %v261, 0.3275911
  %v278 = vmul.f32 %v262, 0.3275911
  %v279 = vmul.f32 %v263, 0.3275911
  %v280 = vmul.f32 %v264, 0.3275911
  %v281 = vmul.f32 %v265, 0.3275911
  %v282 = vmul.f32 %v266, 0.3275911
  %v283 = vmul.f32 %v267, 0.3275911
  %v284 = vmul.f32 %v268, 0.3275911
  %v285 = vmul.f32 %v269, 0.3275911
  %v286 = vadd.f32 %v270, 1.0
  %v287 = vadd.f32 %v271, 1.0
  %v288 = vadd.f32 %v272, 1.0
  %v289 = vadd.f32 %v273, 1.0
  %v290 = vadd.f32 %v274, 1.0
  %v291 = vadd.f32 %v275, 1.0
  %v292 = vadd.f32 %v276, 1.0
  %v293 = vadd.f32 %v277, 1.0
  %v294 = vadd.f32 %v278, 1.0
  %v295 = vadd.f32 %v279, 1.0
  %v296 = vadd.f32 %v280, 1.0
  %v297 = vadd.f32 %v281, 1.0
  %v298 = vadd.f32 %v282, 1.0
  %v299 = vadd.f32 %v283, 1.0
  %v300 = vadd.f32 %v284, 1.0
  %v301 = vadd.f32 %v285, 1.0
  %v302 = vrcp.pop %v286
  %v303 = vmul.f32 1.0, %v302
  %v304 = vrcp.pop %v287
  %v305 = vmul.f32 1.0, %v304
  %v306 = vrcp.pop %v288
  %v307 = vmul.f32 1.0, %v306
  %v308 = vrcp.pop %v289
  %v309 = vmul.f32 1.0, %v308
  %v310 = vrcp.pop %v290
  %v311 = vmul.f32 1.0, %v310
  %v312 = vrcp.pop %v291
  %v313 = vmul.f32 1.0, %v312
  %v314 = vrcp.pop %v292
  %v315 = vmul.f32 1.0, %v314
  %v316 = vrcp.pop %v293
  %v317 = vmul.f32 1.0, %v316
  %v318 = vrcp.pop %v294
  %v319 = vmul.f32 1.0, %v318
  %v320 = vrcp.pop %v295
  %v321 = vmul.f32 1.0, %v320
  %v322 = vrcp.pop %v296
  %v323 = vmul.f32 1.0, %v322
  %v324 = vrcp.pop %v297
  %v325 = vmul.f32 1.0, %v324
  %v326 = vrcp.pop %v298
  %v327 = vmul.f32 1.0, %v326
  %v328 = vrcp.pop %v299
  %v329 = vmul.f32 1.0, %v328
  %v330 = vrcp.pop %v300
  %v331 = vmul.f32 1.0, %v330
  %v332 = vrcp.pop %v301
  %v333 = vmul.f32 1.0, %v332
  %v334 = vmul.f32 %v303, 1.0614054
  %v335 = vmul.f32 %v305, 1.0614054
  %v336 = vmul.f32 %v307, 1.0614054
  %v337 = vmul.f32 %v309, 1.0614054
  %v338 = vmul.f32 %v311, 1.0614054
  %v339 = vmul.f32 %v313, 1.0614054
  %v340 = vmul.f32 %v315, 1.0614054
  %v341 = vmul.f32 %v317, 1.0614054
  %v342 = vmul.f32 %v319, 1.0614054
  %v343 = vmul.f32 %v321, 1.0614054
  %v344 = vmul.f32 %v323, 1.0614054
  %v345 = vmul.f32 %v325, 1.0614054
  %v346 = vmul.f32 %v327, 1.0614054
  %v347 = vmul.f32 %v329, 1.0614054
  %v348 = vmul.f32 %v331, 1.0614054
  %v349 = vmul.f32 %v333, 1.0614054
  %v350 = vadd.f32 %v334, -1.4531521
  %v351 = vadd.f32 %v335, -1.4531521
  %v352 = vadd.f32 %v336, -1.4531521
  %v353 = vadd.f32 %v337, -1.4531521
  %v354 = vadd.f32 %v338, -1.4531521
  %v355 = vadd.f32 %v339, -1.4531521
  %v356 = vadd.f32 %v340, -1.4531521
  %v357 = vadd.f32 %v341, -1.4531521
  %v358 = vadd.f32 %v342, -1.4531521
  %v359 = vadd.f32 %v343, -1.4531521
  %v360 = vadd.f32 %v344, -1.4531521
  %v361 = vadd.f32 %v345, -1.4531521
  %v362 = vadd.f32 %v346, -1.4531521
  %v363 = vadd.f32 %v347, -1.4531521
  %v364 = vadd.f32 %v348, -1.4531521
  %v365 = vadd.f32 %v349, -1.4531521
  %v366 = vmul.f32 %v350, %v303
  %v367 = vmul.f32 %v351, %v305
  %v368 = vmul.f32 %v352, %v307
  %v369 = vmul.f32 %v353, %v309
  %v370 = vmul.f32 %v354, %v311
  %v371 = vmul.f32 %v355, %v313
  %v372 = vmul.f32 %v356, %v315
  %v373 = vmul.f32 %v357, %v317
  %v374 = vmul.f32 %v358, %v319
  %v375 = vmul.f32 %v359, %v321
  %v376 = vmul.f32 %v360, %v323
  %v377 = vmul.f32 %v361, %v325
  %v378 = vmul.f32 %v362, %v327
  %v379 = vmul.f32 %v363, %v329
  %v380 = vmul.f32 %v364, %v331
  %v381 = vmul.f32 %v365, %v333
  %v382 = vadd.f32 %v366, 1.4214138
  %v383 = vadd.f32 %v367, 1.4214138
  %v384 = vadd.f32 %v368, 1.4214138
  %v385 = vadd.f32 %v369, 1.4214138
  %v386 = vadd.f32 %v370, 1.4214138
  %v387 = vadd.f32 %v371, 1.4214138
  %v388 = vadd.f32 %v372, 1.4214138
  %v389 = vadd.f32 %v373, 1.4214138
  %v390 = vadd.f32 %v374, 1.4214138
  %v391 = vadd.f32 %v375, 1.4214138
  %v392 = vadd.f32 %v376, 1.4214138
  %v393 = vadd.f32 %v377, 1.4214138
  %v394 = vadd.f32 %v378, 1.4214138
  %v395 = vadd.f32 %v379, 1.4214138
  %v396 = vadd.f32 %v380, 1.4214138
  %v397 = vadd.f32 %v381, 1.4214138
  %v398 = vmul.f32 %v382, %v303
  %v399 = vmul.f32 %v383, %v305
  %v400 = vmul.f32 %v384, %v307
  %v401 = vmul.f32 %v385, %v309
  %v402 = vmul.f32 %v386, %v311
  %v403 = vmul.f32 %v387, %v313
  %v404 = vmul.f32 %v388, %v315
  %v405 = vmul.f32 %v389, %v317
  %v406 = vmul.f32 %v390, %v319
  %v407 = vmul.f32 %v391, %v321
  %v408 = vmul.f32 %v392, %v323
  %v409 = vmul.f32 %v393, %v325
  %v410 = vmul.f32 %v394, %v327
  %v411 = vmul.f32 %v395, %v329
  %v412 = vmul.f32 %v396, %v331
  %v413 = vmul.f32 %v397, %v333
  %v414 = vadd.f32 %v398, -0.28449672
  %v415 = vadd.f32 %v399, -0.28449672
  %v416 = vadd.f32 %v400, -0.28449672
  %v417 = vadd.f32 %v401, -0.28449672
  %v418 = vadd.f32 %v402, -0.28449672
  %v419 = vadd.f32 %v403, -0.28449672
  %v420 = vadd.f32 %v404, -0.28449672
  %v421 = vadd.f32 %v405, -0.28449672
  %v422 = vadd.f32 %v406, -0.28449672
  %v423 = vadd.f32 %v407, -0.28449672
  %v424 = vadd.f32 %v408, -0.28449672
  %v425 = vadd.f32 %v409, -0.28449672
  %v426 = vadd.f32 %v410, -0.28449672
  %v427 = vadd.f32 %v411, -0.28449672
  %v428 = vadd.f32 %v412, -0.28449672
  %v429 = vadd.f32 %v413, -0.28449672
  %v430 = vmul.f32 %v414, %v303
  %v431 = vmul.f32 %v415, %v305
  %v432 = vmul.f32 %v416, %v307
  %v433 = vmul.f32 %v417, %v309
  %v434 = vmul.f32 %v418, %v311
  %v435 = vmul.f32 %v419, %v313
  %v436 = vmul.f32 %v420, %v315
  %v437 = vmul.f32 %v421, %v317
  %v438 = vmul.f32 %v422, %v319
  %v439 = vmul.f32 %v423, %v321
  %v440 = vmul.f32 %v424, %v323
  %v441 = vmul.f32 %v425, %v325
  %v442 = vmul.f32 %v426, %v327
  %v443 = vmul.f32 %v427, %v329
  %v444 = vmul.f32 %v428, %v331
  %v445 = vmul.f32 %v429, %v333
  %v446 = vadd.f32 %v430, 0.2548296
  %v447 = vadd.f32 %v431, 0.2548296
  %v448 = vadd.f32 %v432, 0.2548296
  %v449 = vadd.f32 %v433, 0.2548296
  %v450 = vadd.f32 %v434, 0.2548296
  %v451 = vadd.f32 %v435, 0.2548296
  %v452 = vadd.f32 %v436, 0.2548296
  %v453 = vadd.f32 %v437, 0.2548296
  %v454 = vadd.f32 %v438, 0.2548296
  %v455 = vadd.f32 %v439, 0.2548296
  %v456 = vadd.f32 %v440, 0.2548296
  %v457 = vadd.f32 %v441, 0.2548296
  %v458 = vadd.f32 %v442, 0.2548296
  %v459 = vadd.f32 %v443, 0.2548296
  %v460 = vadd.f32 %v444, 0.2548296
  %v461 = vadd.f32 %v445, 0.2548296
  %v462 = vmul.f32 %v446, %v303
  %v463 = vmul.f32 %v447, %v305
  %v464 = vmul.f32 %v448, %v307
  %v465 = vmul.f32 %v449, %v309
  %v466 = vmul.f32 %v450, %v311
  %v467 = vmul.f32 %v451, %v313
  %v468 = vmul.f32 %v452, %v315
  %v469 = vmul.f32 %v453, %v317
  %v470 = vmul.f32 %v454, %v319
  %v471 = vmul.f32 %v455, %v321
  %v472 = vmul.f32 %v456, %v323
  %v473 = vmul.f32 %v457, %v325
  %v474 = vmul.f32 %v458, %v327
  %v475 = vmul.f32 %v459, %v329
  %v476 = vmul.f32 %v460, %v331
  %v477 = vmul.f32 %v461, %v333
  %v478 = vsub.f32 0.0, %v254
  %v479 = vsub.f32 0.0, %v255
  %v480 = vsub.f32 0.0, %v256
  %v481 = vsub.f32 0.0, %v257
  %v482 = vsub.f32 0.0, %v258
  %v483 = vsub.f32 0.0, %v259
  %v484 = vsub.f32 0.0, %v260
  %v485 = vsub.f32 0.0, %v261
  %v486 = vsub.f32 0.0, %v262
  %v487 = vsub.f32 0.0, %v263
  %v488 = vsub.f32 0.0, %v264
  %v489 = vsub.f32 0.0, %v265
  %v490 = vsub.f32 0.0, %v266
  %v491 = vsub.f32 0.0, %v267
  %v492 = vsub.f32 0.0, %v268
  %v493 = vsub.f32 0.0, %v269
  %v494 = vmul.f32 %v478, %v254
  %v495 = vmul.f32 %v479, %v255
  %v496 = vmul.f32 %v480, %v256
  %v497 = vmul.f32 %v481, %v257
  %v498 = vmul.f32 %v482, %v258
  %v499 = vmul.f32 %v483, %v259
  %v500 = vmul.f32 %v484, %v260
  %v501 = vmul.f32 %v485, %v261
  %v502 = vmul.f32 %v486, %v262
  %v503 = vmul.f32 %v487, %v263
  %v504 = vmul.f32 %v488, %v264
  %v505 = vmul.f32 %v489, %v265
  %v506 = vmul.f32 %v490, %v266
  %v507 = vmul.f32 %v491, %v267
  %v508 = vmul.f32 %v492, %v268
  %v509 = vmul.f32 %v493, %v269
  %v510 = vmul.f32 %v494, 1.442695
  %v511 = vpow.pop %v510
  %v512 = vmul.f32 %v495, 1.442695
  %v513 = vpow.pop %v512
  %v514 = vmul.f32 %v496, 1.442695
  %v515 = vpow.pop %v514
  %v516 = vmul.f32 %v497, 1.442695
  %v517 = vpow.pop %v516
  %v518 = vmul.f32 %v498, 1.442695
  %v519 = vpow.pop %v518
  %v520 = vmul.f32 %v499, 1.442695
  %v521 = vpow.pop %v520
  %v522 = vmul.f32 %v500, 1.442695
  %v523 = vpow.pop %v522
  %v524 = vmul.f32 %v501, 1.442695
  %v525 = vpow.pop %v524
  %v526 = vmul.f32 %v502, 1.442695
  %v527 = vpow.pop %v526
  %v528 = vmul.f32 %v503, 1.442695
  %v529 = vpow.pop %v528
  %v530 = vmul.f32 %v504, 1.442695
  %v531 = vpow.pop %v530
  %v532 = vmul.f32 %v505, 1.442695
  %v533 = vpow.pop %v532
  %v534 = vmul.f32 %v506, 1.442695
  %v535 = vpow.pop %v534
  %v536 = vmul.f32 %v507, 1.442695
  %v537 = vpow.pop %v536
  %v538 = vmul.f32 %v508, 1.442695
  %v539 = vpow.pop %v538
  %v540 = vmul.f32 %v509, 1.442695
  %v541 = vpow.pop %v540
  %v542 = vmul.f32 %v462, %v511
  %v543 = vmul.f32 %v463, %v513
  %v544 = vmul.f32 %v464, %v515
  %v545 = vmul.f32 %v465, %v517
  %v546 = vmul.f32 %v466, %v519
  %v547 = vmul.f32 %v467, %v521
  %v548 = vmul.f32 %v468, %v523
  %v549 = vmul.f32 %v469, %v525
  %v550 = vmul.f32 %v470, %v527
  %v551 = vmul.f32 %v471, %v529
  %v552 = vmul.f32 %v472, %v531
  %v553 = vmul.f32 %v473, %v533
  %v554 = vmul.f32 %v474, %v535
  %v555 = vmul.f32 %v475, %v537
  %v556 = vmul.f32 %v476, %v539
  %v557 = vmul.f32 %v477, %v541
  %v558 = vsub.f32 1.0, %v542
  %v559 = vsub.f32 1.0, %v543
  %v560 = vsub.f32 1.0, %v544
  %v561 = vsub.f32 1.0, %v545
  %v562 = vsub.f32 1.0, %v546
  %v563 = vsub.f32 1.0, %v547
  %v564 = vsub.f32 1.0, %v548
  %v565 = vsub.f32 1.0, %v549
  %v566 = vsub.f32 1.0, %v550
  %v567 = vsub.f32 1.0, %v551
  %v568 = vsub.f32 1.0, %v552
  %v569 = vsub.f32 1.0, %v553
  %v570 = vsub.f32 1.0, %v554
  %v571 = vsub.f32 1.0, %v555
  %v572 = vsub.f32 1.0, %v556
  %v573 = vsub.f32 1.0, %v557
  %v574 = vmul.f32 %v238, %v558
  %v575 = vmul.f32 %v239, %v559
  %v576 = vmul.f32 %v240, %v560
  %v577 = vmul.f32 %v241, %v561
  %v578 = vmul.f32 %v242, %v562
  %v579 = vmul.f32 %v243, %v563
  %v580 = vmul.f32 %v244, %v564
  %v581 = vmul.f32 %v245, %v565
  %v582 = vmul.f32 %v246, %v566
  %v583 = vmul.f32 %v247, %v567
  %v584 = vmul.f32 %v248, %v568
  %v585 = vmul.f32 %v249, %v569
  %v586 = vmul.f32 %v250, %v570
  %v587 = vmul.f32 %v251, %v571
  %v588 = vmul.f32 %v252, %v572
  %v589 = vmul.f32 %v253, %v573
  %v590 = vadd.f32 %v574, 1.0
  %v591 = vadd.f32 %v575, 1.0
  %v592 = vadd.f32 %v576, 1.0
  %v593 = vadd.f32 %v577, 1.0
  %v594 = vadd.f32 %v578, 1.0
  %v595 = vadd.f32 %v579, 1.0
  %v596 = vadd.f32 %v580, 1.0
  %v597 = vadd.f32 %v581, 1.0
  %v598 = vadd.f32 %v582, 1.0
  %v599 = vadd.f32 %v583, 1.0
  %v600 = vadd.f32 %v584, 1.0
  %v601 = vadd.f32 %v585, 1.0
  %v602 = vadd.f32 %v586, 1.0
  %v603 = vadd.f32 %v587, 1.0
  %v604 = vadd.f32 %v588, 1.0
  %v605 = vadd.f32 %v589, 1.0
  %v606 = vmul.f32 %v190, %v590
  %v607 = vmul.f32 %v191, %v591
  %v608 = vmul.f32 %v192, %v592
  %v609 = vmul.f32 %v193, %v593
  %v610 = vmul.f32 %v194, %v594
  %v611 = vmul.f32 %v195, %v595
  %v612 = vmul.f32 %v196, %v596
  %v613 = vmul.f32 %v197, %v597
  %v614 = vmul.f32 %v198, %v598
  %v615 = vmul.f32 %v199, %v599
  %v616 = vmul.f32 %v200, %v600
  %v617 = vmul.f32 %v201, %v601
  %v618 = vmul.f32 %v202, %v602
  %v619 = vmul.f32 %v203, %v603
  %v620 = vmul.f32 %v204, %v604
  %v621 = vmul.f32 %v205, %v605
  %v622 = vpack.c.bf16 %v607, %v606
  %v623 = vpack.c.bf16 %v609, %v608
  %v624 = vpack.c.bf16 %v611, %v610
  %v625 = vpack.c.bf16 %v613, %v612
  %v626 = vpack.c.bf16 %v615, %v614
  %v627 = vpack.c.bf16 %v617, %v616
  %v628 = vpack.c.bf16 %v619, %v618
  %v629 = vpack.c.bf16 %v621, %v620
  %v630 = vld [vmem:[%s3] sm:$0xf]
  %v631 = vld [vmem:[%s3 + $0x4] sm:$0xf]
  %v632 = vld [vmem:[%s3 + $0x8] sm:$0xf]
  %v633 = vld [vmem:[%s3 + $0xc] sm:$0xf]
  %v634 = vld [vmem:[%s3 + $0x10] sm:$0xf]
  %v635 = vld [vmem:[%s3 + $0x14] sm:$0xf]
  %v636 = vld [vmem:[%s3 + $0x18] sm:$0xf]
  %v637 = vld [vmem:[%s3 + $0x1c] sm:$0xf]
  %v638 = vld [vmem:[%s3 + $0x20] sm:$0xf]
  %v639 = vld [vmem:[%s3 + $0x24] sm:$0xf]
  %v640 = vld [vmem:[%s3 + $0x28] sm:$0xf]
  %v641 = vld [vmem:[%s3 + $0x2c] sm:$0xf]
  %v642 = vld [vmem:[%s3 + $0x30] sm:$0xf]
  %v643 = vld [vmem:[%s3 + $0x34] sm:$0xf]
  %v644 = vld [vmem:[%s3 + $0x38] sm:$0xf]
  %v645 = vld [vmem:[%s3 + $0x3c] sm:$0xf]
  %v646 = vld [vmem:[%s4] sm:$0x1]
  %v648 = vlaneseq
  %v649 = vshrl.u32 %v648, 7
  %v650 = vsub.s32 0, %v649
  %v651 = vrot.slane %v646, %v650
  %v669 = vunpack.c.l.b16 %v630
  %v670 = vunpack.c.l.b16 %v631
  %v671 = vunpack.c.l.b16 %v632
  %v672 = vunpack.c.l.b16 %v633
  %v673 = vunpack.c.l.b16 %v634
  %v674 = vunpack.c.l.b16 %v635
  %v675 = vunpack.c.l.b16 %v636
  %v676 = vunpack.c.l.b16 %v637
  %v677 = vunpack.c.l.b16 %v638
  %v678 = vunpack.c.l.b16 %v639
  %v679 = vunpack.c.l.b16 %v640
  %v680 = vunpack.c.l.b16 %v641
  %v681 = vunpack.c.l.b16 %v642
  %v682 = vunpack.c.l.b16 %v643
  %v683 = vunpack.c.l.b16 %v644
  %v684 = vunpack.c.l.b16 %v645
  %v685 = vpack.c.b16 %v670, %v669
  %v686 = vpack.c.b16 %v672, %v671
  %v687 = vpack.c.b16 %v674, %v673
  %v688 = vpack.c.b16 %v676, %v675
  %v689 = vpack.c.b16 %v678, %v677
  %v690 = vpack.c.b16 %v680, %v679
  %v691 = vpack.c.b16 %v682, %v681
  %v692 = vpack.c.b16 %v684, %v683
  %701 = vmatprep.subr.bf16.mxu0 0
  %702 = vmatpush1.bf16.msra.mxu0 %v692
  %703 = vmatprep.subr.bf16.mxu0 0
  %704 = vmatpush1.bf16.msra.mxu0 %v691
  %705 = vmatprep.subr.bf16.mxu0 0
  %706 = vmatpush1.bf16.msra.mxu0 %v690
  %707 = vmatprep.subr.bf16.mxu0 0
  %708 = vmatpush1.bf16.msra.mxu0 %v689
  %709 = vmatprep.subr.bf16.mxu0 0
  %710 = vmatpush1.bf16.msra.mxu0 %v688
  %711 = vmatprep.subr.bf16.mxu0 0
  %712 = vmatpush1.bf16.msra.mxu0 %v687
  %713 = vmatprep.subr.bf16.mxu0 0
  %714 = vmatpush1.bf16.msra.mxu0 %v686
  %715 = vmatprep.subr.bf16.mxu0 0
  %716 = vmatpush1.bf16.msra.mxu0 %v685
  %717 = vmatprep.subr.bf16.mxu0 0
  %718 = vmatpush2.bf16.msra.mxu0 0
  %719 = vmatprep.subr.bf16.mxu0 0
  %720 = vmatpush2.bf16.msra.mxu0 0
  %721 = vmatprep.subr.bf16.mxu0 0
  %722 = vmatpush2.bf16.msra.mxu0 0
  %723 = vmatprep.subr.bf16.mxu0 0
  %724 = vmatpush2.bf16.msra.mxu0 0
  %725 = vmatprep.subr.bf16.mxu0 0
  %726 = vmatpush2.bf16.msra.mxu0 0
  %727 = vmatprep.subr.bf16.mxu0 0
  %728 = vmatpush2.bf16.msra.mxu0 0
  %729 = vmatprep.subr.bf16.mxu0 0
  %730 = vmatpush2.bf16.msra.mxu0 0
  %731 = vmatprep.subr.bf16.mxu0 0
  %732 = vmatpush2.bf16.msra.mxu0 0
  %733 = vmatprep.mubr.bf16.mxu0 0
  %734 = vmatmul.mubr.bf16.gmra.mxu0 %v622
  %v735 = vpop.f32.mrf.mxu0
  %v736 = vadd.f32 %v651, %v735
  %v737 = vpop.f32.mrf.mxu0
  %v738 = vpop.f32.mrf.mxu0
  %v739 = vadd.f32 %v651, %v738
  %v740 = vpop.f32.mrf.mxu0
  %741 = vmatprep.mubr.bf16.mxu0 0
  %742 = vmatmul.mubr.bf16.gmra.mxu0 %v623
  %v743 = vpop.f32.mrf.mxu0
  %v744 = vadd.f32 %v651, %v743
  %v745 = vpop.f32.mrf.mxu0
  %v746 = vpop.f32.mrf.mxu0
  %v747 = vadd.f32 %v651, %v746
  %v748 = vpop.f32.mrf.mxu0
  %749 = vmatprep.mubr.bf16.mxu0 0
  %750 = vmatmul.mubr.bf16.gmra.mxu0 %v624
  %v751 = vpop.f32.mrf.mxu0
  %v752 = vadd.f32 %v651, %v751
  %v753 = vpop.f32.mrf.mxu0
  %v754 = vpop.f32.mrf.mxu0
  %v755 = vadd.f32 %v651, %v754
  %v756 = vpop.f32.mrf.mxu0
  %757 = vmatprep.mubr.bf16.mxu0 0
  %758 = vmatmul.mubr.bf16.gmra.mxu0 %v625
  %v759 = vpop.f32.mrf.mxu0
  %v760 = vadd.f32 %v651, %v759
  %v761 = vpop.f32.mrf.mxu0
  %v762 = vpop.f32.mrf.mxu0
  %v763 = vadd.f32 %v651, %v762
  %v764 = vpop.f32.mrf.mxu0
  %765 = vmatprep.mubr.bf16.mxu0 0
  %766 = vmatmul.mubr.bf16.gmra.mxu0 %v626
  %v767 = vpop.f32.mrf.mxu0
  %v768 = vadd.f32 %v651, %v767
  %v769 = vpop.f32.mrf.mxu0
  %v770 = vpop.f32.mrf.mxu0
  %v771 = vadd.f32 %v651, %v770
  %v772 = vpop.f32.mrf.mxu0
  %773 = vmatprep.mubr.bf16.mxu0 0
  %774 = vmatmul.mubr.bf16.gmra.mxu0 %v627
  %v775 = vpop.f32.mrf.mxu0
  %v776 = vadd.f32 %v651, %v775
  %v777 = vpop.f32.mrf.mxu0
  %v778 = vpop.f32.mrf.mxu0
  %v779 = vadd.f32 %v651, %v778
  %v780 = vpop.f32.mrf.mxu0
  %781 = vmatprep.mubr.bf16.mxu0 0
  %782 = vmatmul.mubr.bf16.gmra.mxu0 %v628
  %v783 = vpop.f32.mrf.mxu0
  %v784 = vadd.f32 %v651, %v783
  %v785 = vpop.f32.mrf.mxu0
  %v786 = vpop.f32.mrf.mxu0
  %v787 = vadd.f32 %v651, %v786
  %v788 = vpop.f32.mrf.mxu0
  %789 = vmatprep.mubr.bf16.mxu0 0
  %790 = vmatmul.mubr.bf16.gmra.mxu0 %v629
  %v791 = vpop.f32.mrf.mxu0
  %v792 = vadd.f32 %v651, %v791
  %v793 = vpop.f32.mrf.mxu0
  %v794 = vpop.f32.mrf.mxu0
  %v795 = vadd.f32 %v651, %v794
  %v796 = vpop.f32.mrf.mxu0
  %797 = vdwg.mxu0
  %798 = vst.msk [vmem:[%s5] sm:$0xff] %vm68, %v736
  %799 = vst.msk [vmem:[%s5 + $0x8] sm:$0xff] %vm68, %v739
  %800 = vst.msk [vmem:[%s5 + $0x10] sm:$0xff] %vm68, %v744
  %801 = vst.msk [vmem:[%s5 + $0x18] sm:$0xff] %vm68, %v747
  %802 = vst.msk [vmem:[%s5 + $0x20] sm:$0xff] %vm68, %v752
  %803 = vst.msk [vmem:[%s5 + $0x28] sm:$0xff] %vm68, %v755
  %804 = vst.msk [vmem:[%s5 + $0x30] sm:$0xff] %vm68, %v760
  %805 = vst.msk [vmem:[%s5 + $0x38] sm:$0xff] %vm68, %v763
  %806 = vst.msk [vmem:[%s5 + $0x40] sm:$0xff] %vm68, %v768
  %807 = vst.msk [vmem:[%s5 + $0x48] sm:$0xff] %vm68, %v771
  %808 = vst.msk [vmem:[%s5 + $0x50] sm:$0xff] %vm68, %v776
  %809 = vst.msk [vmem:[%s5 + $0x58] sm:$0xff] %vm68, %v779
  %810 = vst.msk [vmem:[%s5 + $0x60] sm:$0xff] %vm68, %v784
  %811 = vst.msk [vmem:[%s5 + $0x68] sm:$0xff] %vm68, %v787
  %812 = vst.msk [vmem:[%s5 + $0x70] sm:$0xff] %vm68, %v792
  %813 = vst.msk [vmem:[%s5 + $0x78] sm:$0xff] %vm68, %v795
  // Predicated region
  $region22: #{tpu_custom_call.1} parent=0 // pred_check
    _
  $region23: #{tpu_custom_call.1} parent=0 // pred_check_branch
    %815 = sbr.rel (0) target = $region25
  $region24: #{tpu_custom_call.1} parent=0 // pred_region
    _
  $region25: #{tpu_custom_call.1} parent=0 // pred_fallthru
    _
  // Predicated region
  $region26: #{tpu_custom_call.1} parent=0 // pred_check
    _
  $region27: #{tpu_custom_call.1} parent=0 // pred_check_branch
    %817 = sbr.rel (0) target = $region29
  $region28: #{tpu_custom_call.1} parent=0 // pred_region
    _
  $region29: #{tpu_custom_call.1} parent=0 // pred_fallthru
    _

</llo_original>
